<compile_context>
chip_gen: v6e
topology: v6e:2x2x1
jax: 0.10.0
libtpu: 0.0.40
codegen_flags: <defaults>
</compile_context>

<pallas_src>
import jax
import jax.numpy as jnp
from jax.experimental import pallas as pl
from jax.experimental.pallas import tpu as pltpu


def _gamma_kernel(s_ref, x_ref, o_ref):
    # s_ref: (row_tile, 1) per-row scales; x_ref/o_ref: (row_tile, col_tile)
    # lane-dense tiles.  One broadcasted VPU multiply (plus a free cast when
    # x.dtype != out dtype) per vreg.
    o_ref[...] = x_ref[...].astype(o_ref.dtype) * s_ref[...]


def _sublane_unit(*dtypes):
    """Dtype-aware sublane tiling unit: 8 for 32-bit, 16 for 16-bit, 32 for 8-bit."""
    unit = 8
    for dt in dtypes:
        unit = max(unit, 32 // jnp.dtype(dt).itemsize)
    return unit


def _choose_tiles(R, L, in_dtype, out_dtype, tile_bytes=4 << 20):
    """Pick (row_tile, col_tile) obeying the TPU block constraints:
    each of the last two block dims is either the full array dim or a multiple
    of (sublane_unit, 128).  Ragged remainders are left to pl.cdiv grids."""
    bpe = max(jnp.dtype(in_dtype).itemsize, jnp.dtype(out_dtype).itemsize)
    unit = _sublane_unit(in_dtype, out_dtype)

    # --- columns first: prefer full, contiguous rows whenever they fit. ---
    if L * unit * bpe <= tile_bytes or L <= 128:
        col_tile = L                                   # full dim (always legal)
    else:
        col_tile = max(128, (tile_bytes // (unit * bpe)) // 128 * 128)
        col_tile = min(col_tile, max(128, (L // 128) * 128))   # multiple of 128

    # --- rows: fill the remaining byte budget. ---
    row_cap = max(unit, (tile_bytes // max(1, col_tile * bpe)) // unit * unit)
    row_tile = R if (R <= row_cap or R <= unit) else row_cap   # full dim or k*unit

    # --- v7x megacore: keep >=2 blocks for non-trivial inputs. ---
    if (pl.cdiv(R, row_tile) == 1 and pl.cdiv(L, col_tile) == 1
            and R * L * bpe > (1 << 20) and R > unit):
        half = pl.cdiv(pl.cdiv(R, 2), unit) * unit
        if half < R:
            row_tile = half

    return row_tile, col_tile


def gamma_forward(x, gamma):
    """x: (N, C, H, W); gamma: any shape with C elements (per-channel scale).

    Returns gamma.reshape(1, C, 1, 1) * x, computed by a lane-dense Pallas kernel.
    """
    N, C, H, W = x.shape
    gamma = jnp.asarray(gamma).reshape(-1)
    assert gamma.shape == (C,)

    out_dtype = jnp.result_type(x.dtype, gamma.dtype)   # torch-style promotion

    R, L = N * C, H * W
    x2 = x.reshape(R, L)                                 # free view of contiguous NCHW
    scales = jnp.tile(gamma.astype(out_dtype), N).reshape(R, 1)  # scales[n*C+c]=gamma[c]

    row_tile, col_tile = _choose_tiles(R, L, x.dtype, out_dtype)
    grid = (pl.cdiv(R, row_tile), pl.cdiv(L, col_tile))  # ragged edges clipped by Pallas

    in_item = jnp.dtype(x.dtype).itemsize
    out_item = jnp.dtype(out_dtype).itemsize
    cost = pl.CostEstimate(
        flops=R * L,
        transcendentals=0,
        bytes_accessed=R * L * in_item + R * L * out_item + R * out_item,
    )

    out2 = pl.pallas_call(
        _gamma_kernel,
        out_shape=jax.ShapeDtypeStruct((R, L), out_dtype),
        grid_spec=pltpu.PrefetchScalarGridSpec(
            num_scalar_prefetch=0,
            grid=grid,
            in_specs=[
                # Per-row scale column: index_map depends only on i, so it is
                # fetched once per row block (once total when grid[0] == 1).
                pl.BlockSpec((row_tile, 1), lambda i, j: (i, 0)),
                # Lane-dense data tile (full contiguous rows whenever possible).
                pl.BlockSpec((row_tile, col_tile), lambda i, j: (i, j)),
            ],
            out_specs=pl.BlockSpec((row_tile, col_tile), lambda i, j: (i, j)),
        ),
        compiler_params=pltpu.CompilerParams(
            # Fully parallel grid: lets v7x shard across its 2 TensorCores.
            dimension_semantics=("parallel", "parallel"),
            # ~4 MiB tiles -> ~16-17 MiB double-buffered footprint.  48 MiB is
            # safe on all generations (<= v7x's 64 MiB physical) and lifts v5e
            # past its 16 MiB scoped default.
            vmem_limit_bytes=48 << 20,
        ),
        cost_estimate=cost,
    )(scales, x2)

    return out2.reshape(N, C, H, W)


if __name__ == "__main__":
    key = jax.random.PRNGKey(0)

    # Module shape contract: gamma has 3 elements -> C must be 3.
    N, C, H, W = 2, 3, 16, 16
    x = jax.random.normal(key, (N, C, H, W), dtype=jnp.float32)

    # nn.Parameter(torch.ones(3).view(1, -1, 1, 1)) -> shape (1, 3, 1, 1).
    # Deterministic, non-trivial values so the per-channel broadcast is exercised.
    gamma = (jnp.arange(C, dtype=jnp.float32) + 0.5).reshape(1, C, 1, 1)

    out = gamma_forward(x, gamma)
    out = jax.block_until_ready(out)

    # Reference: exact PyTorch semantics, gamma.view(1, C, 1, 1) * x
    ref = gamma.reshape(1, C, 1, 1) * x
    assert out.shape == x.shape and out.dtype == ref.dtype
    assert jnp.allclose(out, ref, atol=0.0, rtol=0.0)

    print("KERNEL_OK")
</pallas_src>

<mosaic_0001>
module attributes {stable_mosaic.version = 11 : i64} {
  func.func @_gamma_kernel(%arg0: i32, %arg1: i32, %arg2: memref<6x1xf32, #tpu.memory_space<vmem>>, %arg3: memref<6x256xf32, #tpu.memory_space<vmem>>, %arg4: memref<6x256xf32, #tpu.memory_space<vmem>>) attributes {dimension_semantics = [#tpu.dimension_semantics<parallel>, #tpu.dimension_semantics<parallel>], iteration_bounds = array<i64: 1, 1>, scalar_prefetch = 0 : i64, scratch_operands = 0 : i64, tpu.core_type = #tpu.core_type<tc>, window_params = [{transform_indices = @transform_0, window_bounds = array<i64: 6, 1>}, {transform_indices = @transform_1, window_bounds = array<i64: 6, 256>}, {transform_indices = @transform_2, window_bounds = array<i64: 6, 256>}]} {
    %c0 = arith.constant 0 : index
    %c0_0 = arith.constant 0 : index
    %0 = vector.load %arg3[%c0, %c0_0] : memref<6x256xf32, #tpu.memory_space<vmem>>, vector<6x256xf32>
    %c0_1 = arith.constant 0 : index
    %c0_2 = arith.constant 0 : index
    %1 = vector.load %arg2[%c0_1, %c0_2] : memref<6x1xf32, #tpu.memory_space<vmem>>, vector<6x1xf32>
    %2 = vector.broadcast %1 : vector<6x1xf32> to vector<6x256xf32>
    %3 = arith.mulf %0, %2 : vector<6x256xf32>
    %c0_3 = arith.constant 0 : index
    %c0_4 = arith.constant 0 : index
    %4 = vector.load %arg4[%c0_3, %c0_4] : memref<6x256xf32, #tpu.memory_space<vmem>>, vector<6x256xf32>
    tpu.vector_store %arg4[%c0_3, %c0_4], %3 {strides = array<i32>} : memref<6x256xf32, #tpu.memory_space<vmem>>, vector<6x256xf32>,
    return
  }
  func.func @transform_0(%arg0: i32, %arg1: i32) -> (i32, i32) {
    %c0_i32 = arith.constant 0 : i32
    %c0_i32_0 = arith.constant 0 : i32
    return %arg0, %c0_i32 : i32, i32
  }
  func.func @transform_1(%arg0: i32, %arg1: i32) -> (i32, i32) {
    %c0_i32 = arith.constant 0 : i32
    return %arg0, %arg1 : i32, i32
  }
  func.func @transform_2(%arg0: i32, %arg1: i32) -> (i32, i32) {
    %c0_i32 = arith.constant 0 : i32
    return %arg0, %arg1 : i32, i32
  }
}

</mosaic_0001>

<llo_original>
// kernel: tpu_custom_call.1
$region0: #{tpu_custom_call.1}
  #allocation0 [shape = 'u32[]', space=smem, size = 0x4, offset = 0x4, fixed_abs, tag = 'smem constant byte address 0x4 - core index']
  #allocation1 [shape = 'u32[144,128]{1,0:T(1,128)}', space=vmem, size = 0x12000, scoped, tag = 'internal scratch']
  %s0 = inlined_call_operand.vmem [shape: f32[6,1], index: 0, kind: input, shape index: {}]
  %s1 = inlined_call_operand.hbm [shape: f32[6,256], index: 1, kind: input, shape index: {}]
  %s2 = inlined_call_operand.hbm [shape: f32[6,256], index: 2, kind: output, shape index: {}]
  %s3 = sld [smem:[#allocation0]]
  $region22: #{tpu_custom_call.1} parent=0
    _
  %s5 = ssub.s32 1, %s3
  %s6 = scalar_select 0, %s5, %s3
  $region1: #{tpu_custom_call.1} parent=0
    #allocation2 [shape = 'u8[8192]{0}', space=vmem, size = 0x2000, scoped, tag = 'input window, operand 1, single buffered']
    #allocation3 [shape = 's32[1]{0}', space=sflag, size = 0x4, scoped, tag = 'scoped memory for tpu_custom_call.1']
    #allocation4 [shape = 's32[1]{0}', space=sflag, size = 0x4, scoped, tag = 'scoped memory for tpu_custom_call.1']
    #allocation5 [shape = 'u8[8192]{0}', space=vmem, size = 0x2000, scoped, tag = 'output window, operand 0, single buffered']
    %7 = vsyncpa [#allocation3], 0
    %8 = vsyncpa [#allocation4], 0
    // Predicated region
    $region2: #{tpu_custom_call.1} parent=1 // pred_check
      _
    $region3: #{tpu_custom_call.1} parent=1 // pred_check_branch
      %10 = sbr.rel (0) target = $region5
    $region4: #{tpu_custom_call.1} parent=1 // pred_region
      _
    $region5: #{tpu_custom_call.1} parent=1 // pred_fallthru
      _
    // Predicated region
    $region6: #{tpu_custom_call.1} parent=1 // pred_check
      _
    $region7: #{tpu_custom_call.1} parent=1 // pred_check_branch
      %12 = sbr.rel (0) target = $region9
    $region8: #{tpu_custom_call.1} parent=1 // pred_region
      %s14 = ssub.s32 256, 256
      %15 = vsyncadd [#allocation3], %s14
      %s17 = sshll.u32 [#allocation2], 4
      %s18 = int_to_ptr.vmem [resolvable:$true] %s17
      %20 = dma.hbm_to_vmem [thread:$0]  %s1, 256, %s18, [#allocation3]
    $region9: #{tpu_custom_call.1} parent=1 // pred_fallthru
      _
    // Predicated region
    $region10: #{tpu_custom_call.1} parent=1 // pred_check
      _
    $region11: #{tpu_custom_call.1} parent=1 // pred_check_branch
      %22 = sbr.rel (0) target = $region13
    $region12: #{tpu_custom_call.1} parent=1 // pred_region
      %23 = dma.done [#allocation3], 256
    $region13: #{tpu_custom_call.1} parent=1 // pred_fallthru
      _
    %v24 = vld [vmem:[#allocation2] sm:$0x3f]
    %v25 = vld [vmem:[#allocation2 + $0x8] sm:$0x3f]
    %v26 = vld [vmem:[%s0] sm:$0x3f]
    %28 = vset.pattern.permute.xlu0 0
    %29 = vperm.xlu0 %28, %v26
    %v30 = vpop.permute.xlu0 %29
    %v32 = vmul.f32 %v24, %v30
    %v33 = vmul.f32 %v25, %v30
    %34 = vst [vmem:[#allocation5] sm:$0x3f] %v32
    %35 = vst [vmem:[#allocation5 + $0x8] sm:$0x3f] %v33
    // Predicated region
    $region14: #{tpu_custom_call.1} parent=1 // pred_check
      _
    $region15: #{tpu_custom_call.1} parent=1 // pred_check_branch
      %37 = sbr.rel (0) target = $region17
    $region16: #{tpu_custom_call.1} parent=1 // pred_region
      %s39 = ssub.s32 256, 256
      %40 = vsyncadd [#allocation4], %s39
      %s42 = sshll.u32 [#allocation5], 4
      %s43 = int_to_ptr.vmem [resolvable:$true] %s42
      %45 = dma.vmem_to_hbm [thread:$0]  %s43, 256, %s2, [#allocation4]
    $region17: #{tpu_custom_call.1} parent=1 // pred_fallthru
      _
    // Predicated region
    $region18: #{tpu_custom_call.1} parent=1 // pred_check
      _
    $region19: #{tpu_custom_call.1} parent=1 // pred_check_branch
      %47 = sbr.rel (0) target = $region21
    $region20: #{tpu_custom_call.1} parent=1 // pred_region
      %48 = dma.done [#allocation4], 256
    $region21: #{tpu_custom_call.1} parent=1 // pred_fallthru
      _
    %49 = vsyncpa [#allocation3], 1
    %50 = vsyncpa [#allocation4], 1

</llo_original>
